<compile_context>
chip_gen: v7x
topology: tpu7x:2x2x1
jax: 0.10.0
libtpu: 0.0.40
codegen_flags: <defaults>
</compile_context>

<pallas_src>
import math
from functools import partial

import jax
import jax.numpy as jnp
from jax.experimental import pallas as pl
from jax.experimental.pallas import tpu as pltpu


# ----------------------------------------------------------------------------
# tiling helpers
# ----------------------------------------------------------------------------
def _pick_tile(dim, target, align):
    """Largest `align`-multiple tile <= target that divides dim, else full dim."""
    # TODO(synk): for real non-divisible shapes (vocab 50257, odd L) this falls back to
    #             the full dimension; a cdiv grid with padded/masked edge tiles would be
    #             needed before scaling up.
    if dim <= target:
        return dim
    t = (target // align) * align
    while t >= align:
        if dim % t == 0:
            return t
        t -= align
    return dim


def _apply_act(y, act):
    if act == "gelu":
        # TODO(synk): reference Mlp uses exact erf GELU; tanh approximation used here.
        return jax.nn.gelu(y, approximate=True)
    if act == "relu":
        return jnp.maximum(y, 0.0)
    return y


# ----------------------------------------------------------------------------
# Tiled linear (bf16 in, f32 accumulate, optional activation / fused residual)
# ----------------------------------------------------------------------------
def _matmul_kernel(x_ref, w_ref, b_ref, o_ref, acc_ref, *, act):
    @pl.when(pl.program_id(2) == 0)
    def _():
        acc_ref[...] = jnp.zeros_like(acc_ref)

    acc_ref[...] += jnp.dot(x_ref[...], w_ref[...],
                            preferred_element_type=jnp.float32)

    @pl.when(pl.program_id(2) == pl.num_programs(2) - 1)
    def _():
        y = _apply_act(acc_ref[...] + b_ref[...], act)
        o_ref[...] = y.astype(o_ref.dtype)


def _matmul_res_kernel(x_ref, w_ref, b_ref, r_ref, o_ref, acc_ref, *, act):
    @pl.when(pl.program_id(2) == 0)
    def _():
        acc_ref[...] = jnp.zeros_like(acc_ref)

    acc_ref[...] += jnp.dot(x_ref[...], w_ref[...],
                            preferred_element_type=jnp.float32)

    @pl.when(pl.program_id(2) == pl.num_programs(2) - 1)
    def _():
        y = _apply_act(acc_ref[...] + b_ref[...], act)
        y = y + r_ref[...].astype(jnp.float32)          # fused residual add
        o_ref[...] = y.astype(o_ref.dtype)


def pallas_linear(x, w, b, act="none", residual=None, out_dtype=jnp.bfloat16):
    """x: (M, K), w: (K, N), b: (N,) -> (M, N) in out_dtype (bf16 by default)."""
    M, K = x.shape
    _, N = w.shape
    x = x.astype(jnp.bfloat16)
    w = w.astype(jnp.bfloat16)
    b2 = b.reshape(1, N).astype(jnp.float32)

    tm = _pick_tile(M, 512, 16)      # bf16 packs 16 rows per vreg
    tn = _pick_tile(N, 512, 128)
    tk = _pick_tile(K, 512, 128)
    grid = (M // tm, N // tn, K // tk)

    in_specs = [
        pl.BlockSpec((tm, tk), lambda i, j, k: (i, k)),
        pl.BlockSpec((tk, tn), lambda i, j, k: (k, j)),
        pl.BlockSpec((1, tn), lambda i, j, k: (0, j)),
    ]
    args = [x, w, b2]
    if residual is not None:
        in_specs.append(pl.BlockSpec((tm, tn), lambda i, j, k: (i, j)))
        args.append(residual.astype(out_dtype))
        kernel = partial(_matmul_res_kernel, act=act)
    else:
        kernel = partial(_matmul_kernel, act=act)

    return pl.pallas_call(
        kernel,
        out_shape=jax.ShapeDtypeStruct((M, N), out_dtype),
        grid=grid,
        in_specs=in_specs,
        out_specs=pl.BlockSpec((tm, tn), lambda i, j, k: (i, j)),
        scratch_shapes=[pltpu.VMEM((tm, tn), jnp.float32)],
        compiler_params=pltpu.CompilerParams(
            dimension_semantics=("parallel", "parallel", "arbitrary")),
    )(*args)


# ----------------------------------------------------------------------------
# Fused LayerNorm -> Linear (LN recomputed per N-tile in the prologue; removes the
# normalized-activation HBM round trip of a standalone LayerNorm call).
# ----------------------------------------------------------------------------
def _ln_matmul_kernel(x_ref, g_ref, bg_ref, w_ref, b_ref, o_ref, *, act, eps):
    x = x_ref[...].astype(jnp.float32)
    mean = jnp.mean(x, axis=-1, keepdims=True)
    var = jnp.mean(jnp.square(x - mean), axis=-1, keepdims=True)
    xn = (x - mean) * jax.lax.rsqrt(var + eps) * g_ref[...] + bg_ref[...]
    y = jnp.dot(xn.astype(jnp.bfloat16), w_ref[...],
                preferred_element_type=jnp.float32) + b_ref[...]
    o_ref[...] = _apply_act(y, act).astype(o_ref.dtype)


def pallas_ln_linear(x, g, b_ln, w, b, act="none", eps=1e-6, out_dtype=jnp.bfloat16):
    """LayerNorm(x) @ w + b, fused.  x: (M, K), w: (K, N)."""
    M, K = x.shape
    _, N = w.shape
    x = x.astype(jnp.bfloat16)
    w = w.astype(jnp.bfloat16)
    tm = _pick_tile(M, 512, 16)
    tn = _pick_tile(N, 512, 128)
    grid = (M // tm, N // tn)
    return pl.pallas_call(
        partial(_ln_matmul_kernel, act=act, eps=eps),
        out_shape=jax.ShapeDtypeStruct((M, N), out_dtype),
        grid=grid,
        in_specs=[
            pl.BlockSpec((tm, K), lambda i, j: (i, 0)),
            pl.BlockSpec((1, K), lambda i, j: (0, 0)),
            pl.BlockSpec((1, K), lambda i, j: (0, 0)),
            pl.BlockSpec((K, tn), lambda i, j: (0, j)),
            pl.BlockSpec((1, tn), lambda i, j: (0, j)),
        ],
        out_specs=pl.BlockSpec((tm, tn), lambda i, j: (i, j)),
        compiler_params=pltpu.CompilerParams(
            dimension_semantics=("parallel", "parallel")),
    )(x, g.reshape(1, K).astype(jnp.float32), b_ln.reshape(1, K).astype(jnp.float32),
      w, b.reshape(1, N).astype(jnp.float32))


# ----------------------------------------------------------------------------
# Row-tiled LayerNorm (only where the normalized activation itself is an output:
# visual-encoder final LN and decoder final LN / last_hidden_state)
# ----------------------------------------------------------------------------
def _layernorm_kernel(x_ref, g_ref, b_ref, o_ref, *, eps):
    x = x_ref[...].astype(jnp.float32)
    mean = jnp.mean(x, axis=-1, keepdims=True)
    var = jnp.mean(jnp.square(x - mean), axis=-1, keepdims=True)
    y = (x - mean) * jax.lax.rsqrt(var + eps)
    o_ref[...] = (y * g_ref[...] + b_ref[...]).astype(o_ref.dtype)


def pallas_layernorm(x, g, b, eps=1e-6, out_dtype=jnp.bfloat16):
    M, D = x.shape
    tm = _pick_tile(M, 512, 16)
    return pl.pallas_call(
        partial(_layernorm_kernel, eps=eps),
        out_shape=jax.ShapeDtypeStruct((M, D), out_dtype),
        grid=(M // tm,),
        in_specs=[
            pl.BlockSpec((tm, D), lambda i: (i, 0)),
            pl.BlockSpec((1, D), lambda i: (0, 0)),
            pl.BlockSpec((1, D), lambda i: (0, 0)),
        ],
        out_specs=pl.BlockSpec((tm, D), lambda i: (i, 0)),
        compiler_params=pltpu.CompilerParams(dimension_semantics=("parallel",)),
    )(x, g.reshape(1, D).astype(jnp.float32), b.reshape(1, D).astype(jnp.float32))


# ----------------------------------------------------------------------------
# Flash-style attention.  Grid is (B*H, Lq/tq, Lk/tk) so batch x heads is one leading
# parallel axis (even megacore split).  Optional key-padding mask (no-mask path skips
# all mask DMA/VPU work); causal path skips fully-dead (qi, ki) blocks.
# ----------------------------------------------------------------------------
def _make_flash_kernel(scale, causal, has_mask, tq, tk):
    def kernel(*refs):
        if has_mask:
            q_ref, k_ref, v_ref, km_ref, o_ref, m_sc, l_sc, acc_sc = refs
        else:
            q_ref, k_ref, v_ref, o_ref, m_sc, l_sc, acc_sc = refs
            km_ref = None
        qi = pl.program_id(1)
        ki = pl.program_id(2)

        @pl.when(ki == 0)
        def _():
            m_sc[...] = jnp.full_like(m_sc, -jnp.inf)
            l_sc[...] = jnp.zeros_like(l_sc)
            acc_sc[...] = jnp.zeros_like(acc_sc)

        def compute():
            # scale folded into q (O(tq*Dh)) instead of the (tq,tk) score matrix
            q = (q_ref[0].astype(jnp.float32) * scale).astype(jnp.bfloat16)   # (tq, Dh)
            k = k_ref[0]                                                      # (tk, Dh)
            s = jax.lax.dot_general(q, k, (((1,), (1,)), ((), ())),
                                    preferred_element_type=jnp.float32)       # (tq, tk)
            if has_mask or causal:
                valid = None
                if has_mask:
                    valid = jnp.broadcast_to(km_ref[0] > 0, (tq, tk))
                if causal:
                    q_pos = qi * tq + jax.lax.broadcasted_iota(jnp.int32, (tq, tk), 0)
                    k_pos = ki * tk + jax.lax.broadcasted_iota(jnp.int32, (tq, tk), 1)
                    cm = q_pos >= k_pos
                    valid = cm if valid is None else jnp.logical_and(valid, cm)
                s = jnp.where(valid, s, -1e9)

            m_prev = m_sc[...]
            m_new = jnp.maximum(m_prev, jnp.max(s, axis=-1, keepdims=True))
            alpha = jnp.exp(m_prev - m_new)
            p = jnp.exp(s - m_new)
            l_sc[...] = alpha * l_sc[...] + jnp.sum(p, axis=-1, keepdims=True)
            acc_sc[...] = alpha * acc_sc[...] + jnp.dot(
                p.astype(jnp.bfloat16), v_ref[0], preferred_element_type=jnp.float32)
            m_sc[...] = m_new

        if causal:
            # skip key blocks that lie entirely above the causal boundary
            @pl.when(ki * tk <= qi * tq + tq - 1)
            def _():
                compute()
        else:
            compute()

        @pl.when(ki == pl.num_programs(2) - 1)
        def _():
            inv_l = pl.reciprocal(l_sc[...], approx=True)
            o_ref[0] = (acc_sc[...] * inv_l).astype(o_ref.dtype)

    return kernel


def pallas_flash_mha(q, k, v, scale, causal, key_mask=None, num_heads=1):
    """q/k/v: (B*H, L, Dh).  key_mask: (B, 1, Lk) int (1 = valid key) or None."""
    BH, Lq, Dh = q.shape
    Lk = k.shape[1]
    tq = _pick_tile(Lq, 128, 16)
    tk = _pick_tile(Lk, 256, 128)
    grid = (BH, Lq // tq, Lk // tk)
    has_mask = key_mask is not None

    in_specs = [
        pl.BlockSpec((1, tq, Dh), lambda bh, qi, ki: (bh, qi, 0)),
        pl.BlockSpec((1, tk, Dh), lambda bh, qi, ki: (bh, ki, 0)),
        pl.BlockSpec((1, tk, Dh), lambda bh, qi, ki: (bh, ki, 0)),
    ]
    args = [q.astype(jnp.bfloat16), k.astype(jnp.bfloat16), v.astype(jnp.bfloat16)]
    if has_mask:
        B = BH // num_heads
        km = jnp.broadcast_to(key_mask.reshape(B, 1, Lk).astype(jnp.int32),
                              (B, num_heads, Lk)).reshape(BH, 1, Lk)
        in_specs.append(pl.BlockSpec((1, 1, tk), lambda bh, qi, ki: (bh, 0, ki)))
        args.append(km)

    return pl.pallas_call(
        _make_flash_kernel(scale, causal, has_mask, tq, tk),
        out_shape=jax.ShapeDtypeStruct((BH, Lq, Dh), jnp.bfloat16),
        grid=grid,
        in_specs=in_specs,
        out_specs=pl.BlockSpec((1, tq, Dh), lambda bh, qi, ki: (bh, qi, 0)),
        scratch_shapes=[
            pltpu.VMEM((tq, 1), jnp.float32),
            pltpu.VMEM((tq, 1), jnp.float32),
            pltpu.VMEM((tq, Dh), jnp.float32),
        ],
        compiler_params=pltpu.CompilerParams(
            dimension_semantics=("parallel", "parallel", "arbitrary")),
    )(*args)


# ----------------------------------------------------------------------------
# Fused (tied) LM head + masked cross-entropy over a tiled vocab axis.
# Never materializes (M, V) logits nor word_emb.T.  Lane-dense (1, M) loss output.
# ----------------------------------------------------------------------------
def _lmhead_ce_kernel(x_ref, w_ref, b_ref, lab_ref, mask_ref, loss_ref,
                      m_sc, l_sc, g_sc, *, tv):
    j = pl.program_id(1)

    @pl.when(j == 0)
    def _():
        m_sc[...] = jnp.full_like(m_sc, -jnp.inf)
        l_sc[...] = jnp.zeros_like(l_sc)
        g_sc[...] = jnp.zeros_like(g_sc)

    # logits^T tile: (tv, tm) = w (tv, D) . x^T (D, tm), f32 accumulate
    logits = jax.lax.dot_general(
        w_ref[...], x_ref[...], (((1,), (1,)), ((), ())),
        preferred_element_type=jnp.float32) + b_ref[...]

    vocab_idx = j * tv + jax.lax.broadcasted_iota(jnp.int32, logits.shape, 0)
    # label 100 (query-position fill) may match a real vocab row for large vocabs; those
    # rows are always zeroed by loss_mask, matching the reference invariant.
    hit = vocab_idx == lab_ref[...]
    g_sc[...] += jnp.sum(jnp.where(hit, logits, 0.0), axis=0, keepdims=True)

    m_prev = m_sc[...]
    m_new = jnp.maximum(m_prev, jnp.max(logits, axis=0, keepdims=True))
    l_sc[...] = jnp.exp(m_prev - m_new) * l_sc[...] + \
        jnp.sum(jnp.exp(logits - m_new), axis=0, keepdims=True)
    m_sc[...] = m_new

    @pl.when(j == pl.num_programs(1) - 1)
    def _():
        lse = m_sc[...] + jnp.log(l_sc[...])
        loss_ref[...] = (lse - g_sc[...]) * mask_ref[...]


def pallas_lmhead_ce(x, w_emb, bias, labels, mask):
    """x: (M, D), w_emb: (V, D), bias: (V,), labels/mask: (M,) -> per-row loss (M,)."""
    M, D = x.shape
    V = w_emb.shape[0]
    tm = _pick_tile(M, 512, 128)     # x tile resident across vocab axis -> fewer vocab streams
    tv = _pick_tile(V, 512, 128)
    grid = (M // tm, V // tv)

    losses = pl.pallas_call(
        partial(_lmhead_ce_kernel, tv=tv),
        out_shape=jax.ShapeDtypeStruct((1, M), jnp.float32),
        grid=grid,
        in_specs=[
            pl.BlockSpec((tm, D), lambda i, j: (i, 0)),
            pl.BlockSpec((tv, D), lambda i, j: (j, 0)),
            pl.BlockSpec((tv, 1), lambda i, j: (j, 0)),
            pl.BlockSpec((1, tm), lambda i, j: (0, i)),
            pl.BlockSpec((1, tm), lambda i, j: (0, i)),
        ],
        out_specs=pl.BlockSpec((1, tm), lambda i, j: (0, i)),
        scratch_shapes=[
            pltpu.VMEM((1, tm), jnp.float32),
            pltpu.VMEM((1, tm), jnp.float32),
            pltpu.VMEM((1, tm), jnp.float32),
        ],
        compiler_params=pltpu.CompilerParams(
            dimension_semantics=("parallel", "arbitrary")),
    )(x.astype(jnp.bfloat16), w_emb.astype(jnp.bfloat16),
      bias.reshape(V, 1).astype(jnp.float32),
      labels.reshape(1, M).astype(jnp.int32),
      mask.reshape(1, M).astype(jnp.float32))
    return losses[0]


# ----------------------------------------------------------------------------
# Head reshape glue (B, L, D) <-> (B*H, L, Dh)
# ----------------------------------------------------------------------------
# TODO(synk): a zero-copy packed-QKV BlockSpec (indexing heads directly from the qkv
#             output) would remove these transposes, but small Dh (<8 sublanes on the
#             second-to-last dim) violates the (8,128) block constraint; kept as glue.
def to_bh(x, heads):
    B, L, D = x.shape
    Dh = D // heads
    return x.reshape(B, L, heads, Dh).transpose(0, 2, 1, 3).reshape(B * heads, L, Dh)


def from_bh(x, B):
    BH, L, Dh = x.shape
    H = BH // B
    return x.reshape(B, H, L, Dh).transpose(0, 2, 1, 3).reshape(B, L, H * Dh)


# ----------------------------------------------------------------------------
# Transformer / attention-pool / decoder blocks (heavy math via Pallas)
# ----------------------------------------------------------------------------
def transformer_block(x, p, heads, key_mask=None, causal=False):
    B, L, D = x.shape
    Dh = D // heads
    x2 = x.reshape(B * L, D)
    # fused LN -> QKV
    qkv = pallas_ln_linear(x2, p["ln1_g"], p["ln1_b"],
                           p["qkv_w"], p["qkv_b"]).reshape(B, L, 3 * D)
    q, k, v = jnp.split(qkv, 3, axis=-1)
    qh, kh, vh = (to_bh(t, heads) for t in (q, k, v))
    scale = 1.0 / math.sqrt(Dh)
    o = from_bh(pallas_flash_mha(qh, kh, vh, scale, causal,
                                 key_mask=key_mask, num_heads=heads), B)
    x2 = pallas_linear(o.reshape(B * L, D), p["proj_w"], p["proj_b"], residual=x2)
    # fused LN -> FC1 (GELU)
    m = pallas_ln_linear(x2, p["ln2_g"], p["ln2_b"], p["fc1_w"], p["fc1_b"], act="gelu")
    x2 = pallas_linear(m, p["fc2_w"], p["fc2_b"], residual=x2)
    return x2.reshape(B, L, D)


def attention_pool(queries, x, p, heads):
    """Cross attention: learnable queries attend over visual tokens."""
    B, Q, D = queries.shape
    _, L, _ = x.shape
    Dh = D // heads
    q2 = queries.reshape(B * Q, D)
    q = pallas_ln_linear(q2, p["lnq_g"], p["lnq_b"], p["q_w"], p["q_b"]).reshape(B, Q, D)
    kv = pallas_ln_linear(x.reshape(B * L, D), p["lnk_g"], p["lnk_b"],
                          p["kv_w"], p["kv_b"]).reshape(B, L, 2 * D)
    k, v = jnp.split(kv, 2, axis=-1)
    qh, kh, vh = to_bh(q, heads), to_bh(k, heads), to_bh(v, heads)
    scale = 1.0 / math.sqrt(Dh)
    o = from_bh(pallas_flash_mha(qh, kh, vh, scale, False, num_heads=heads), B)
    out2 = pallas_linear(o.reshape(B * Q, D), p["proj_w"], p["proj_b"], residual=q2)
    m = pallas_ln_linear(out2, p["ln2_g"], p["ln2_b"], p["fc1_w"], p["fc1_b"], act="gelu")
    out2 = pallas_linear(m, p["fc2_w"], p["fc2_b"], residual=out2)
    return out2.reshape(B, Q, D)


def visual_encoder(image, p, cfg):
    """TimeSformer-style encoder. Returns (cls_feature, all_token_embeds)."""
    B, C, T, H, W = image.shape
    ps = cfg["patch_size"]
    hp, wp = H // ps, W // ps
    n_patch = hp * wp
    D = cfg["vision_width"]
    # im2col patches ordered (C, ph, pw) to match Conv2d weight flattening.
    x = image.reshape(B, C, T, hp, ps, wp, ps)
    x = x.transpose(0, 2, 3, 5, 1, 4, 6).reshape(B * T * n_patch, C * ps * ps)
    tok = pallas_linear(x, p["patch_w"], p["patch_b"]).reshape(B, T * n_patch, D)
    cls = jnp.broadcast_to(p["cls_token"], (B, 1, D)).astype(jnp.bfloat16)
    tok = jnp.concatenate([cls, tok], axis=1)
    tok = (tok.astype(jnp.float32) + p["pos_embed"]).astype(jnp.bfloat16)
    # TODO(synk): TimeSformer divided space-time attention simplified to joint
    #             space-time self-attention over all (1 + T*num_patches) tokens.
    for blk in p["blocks"]:
        tok = transformer_block(tok, blk, cfg["vision_heads"])
    L = tok.shape[1]
    tok_n = pallas_layernorm(tok.reshape(B * L, D), p["lnf_g"], p["lnf_b"]).reshape(B, L, D)
    return tok_n[:, 0], tok_n


def gpt3_decoder(p, input_embeds, attention_mask, labels, loss_mask, cfg):
    """Simplified DistributedGPT3 forward: causal LM with key-padding mask and
    loss_mask-weighted cross-entropy (Megatron-style), LM head fused with the CE.
    Returns per-position (already mask-weighted) losses and last_hidden_state."""
    B, L, D = input_embeds.shape
    x = (input_embeds.astype(jnp.float32) + p["pos_emb"][:L][None]).astype(jnp.bfloat16)
    key_mask = attention_mask.astype(jnp.int32).reshape(B, 1, L)
    for blk in p["blocks"]:
        x = transformer_block(x, blk, cfg["text_heads"], key_mask=key_mask, causal=True)
    xf = pallas_layernorm(x.reshape(B * L, D), p["lnf_g"], p["lnf_b"]).reshape(B, L, D)
    # tied LM head fused with cross-entropy: no (B*L, V) logits, no word_emb.T copy.
    V = cfg["vocab_size"]
    losses = pallas_lmhead_ce(xf.reshape(B * L, D), p["word_emb"],
                              jnp.zeros((V,), jnp.float32),
                              labels.reshape(B * L), loss_mask.reshape(B * L))
    return {"losses": losses.reshape(B, L), "last_hidden_state": xf}


# ----------------------------------------------------------------------------
# Parameter initialization (deterministic, synthetic; matmul weights in bf16)
# ----------------------------------------------------------------------------
def _linear_params(key, din, dout, std=0.02):
    return (jax.random.normal(key, (din, dout), jnp.float32).astype(jnp.bfloat16) * std,
            jnp.zeros((dout,), jnp.float32))


def _block_params(key, d, mlp_ratio):
    ks = jax.random.split(key, 4)
    qkv_w, qkv_b = _linear_params(ks[0], d, 3 * d)
    proj_w, proj_b = _linear_params(ks[1], d, d)
    fc1_w, fc1_b = _linear_params(ks[2], d, d * mlp_ratio)
    fc2_w, fc2_b = _linear_params(ks[3], d * mlp_ratio, d)
    return dict(
        ln1_g=jnp.ones((d,), jnp.float32), ln1_b=jnp.zeros((d,), jnp.float32),
        ln2_g=jnp.ones((d,), jnp.float32), ln2_b=jnp.zeros((d,), jnp.float32),
        qkv_w=qkv_w, qkv_b=qkv_b, proj_w=proj_w, proj_b=proj_b,
        fc1_w=fc1_w, fc1_b=fc1_b, fc2_w=fc2_w, fc2_b=fc2_b)


def init_params(key, cfg):
    Dv, Dt = cfg["vision_width"], cfg["text_width"]
    C, ps, T = cfg["channels"], cfg["patch_size"], cfg["frames"]
    n_tok = 1 + T * (cfg["img_size"] // ps) ** 2
    keys = jax.random.split(key, 16)

    vis_blocks = [_block_params(k, Dv, cfg["mlp_ratio"])
                  for k in jax.random.split(keys[0], cfg["vision_depth"])]
    patch_w, patch_b = _linear_params(keys[1], C * ps * ps, Dv)
    visual = dict(
        patch_w=patch_w, patch_b=patch_b,
        cls_token=jax.random.normal(keys[2], (1, 1, Dv), jnp.float32) * 0.015,
        pos_embed=jax.random.normal(keys[3], (1, n_tok, Dv), jnp.float32) * 0.015,
        blocks=vis_blocks,
        lnf_g=jnp.ones((Dv,), jnp.float32), lnf_b=jnp.zeros((Dv,), jnp.float32))

    pks = jax.random.split(keys[4], 4)
    q_w, q_b = _linear_params(pks[0], Dv, Dv)
    kv_w, kv_b = _linear_params(pks[1], Dv, 2 * Dv)
    pr_w, pr_b = _linear_params(pks[2], Dv, Dv)
    f1_w, f1_b = _linear_params(pks[3], Dv, Dv * cfg["mlp_ratio"])
    f2_w, f2_b = _linear_params(keys[5], Dv * cfg["mlp_ratio"], Dv)
    attn_pool = dict(
        lnq_g=jnp.ones((Dv,), jnp.float32), lnq_b=jnp.zeros((Dv,), jnp.float32),
        lnk_g=jnp.ones((Dv,), jnp.float32), lnk_b=jnp.zeros((Dv,), jnp.float32),
        ln2_g=jnp.ones((Dv,), jnp.float32), ln2_b=jnp.zeros((Dv,), jnp.float32),
        q_w=q_w, q_b=q_b, kv_w=kv_w, kv_b=kv_b, proj_w=pr_w, proj_b=pr_b,
        fc1_w=f1_w, fc1_b=f1_b, fc2_w=f2_w, fc2_b=f2_b)

    txt_blocks = [_block_params(k, Dt, cfg["mlp_ratio"])
                  for k in jax.random.split(keys[6], cfg["text_depth"])]
    text_decoder = dict(
        word_emb=(jax.random.normal(keys[7], (cfg["vocab_size"], Dt), jnp.float32)
                  * 0.02).astype(jnp.bfloat16),
        pos_emb=jax.random.normal(keys[8], (cfg["max_pos"], Dt), jnp.float32) * 0.02,
        blocks=txt_blocks,
        lnf_g=jnp.ones((Dt,), jnp.float32), lnf_b=jnp.zeros((Dt,), jnp.float32))

    vfc_w, vfc_b = _linear_params(keys[9], Dv, Dt, std=0.015)
    ch1_w, ch1_b = _linear_params(keys[10], Dt, Dt)
    # cls-head final layer stored as (num_classes, Dt) so it can feed the fused
    # matmul+CE kernel directly (same layout as nn.Linear weight).
    ch2_w = (jax.random.normal(keys[11], (cfg["num_classes"], Dt), jnp.float32)
             * 0.02).astype(jnp.bfloat16)
    ch2_b = jnp.zeros((cfg["num_classes"],), jnp.float32)

    return dict(
        visual=visual,
        attn_pool=attn_pool,
        learnable_queries=jax.random.normal(
            keys[12], (1, cfg["num_learnable_token"], Dv), jnp.float32) * 0.015,
        visual_fc_w=vfc_w, visual_fc_b=vfc_b,
        text_decoder=text_decoder,
        cls_head=dict(w1=ch1_w, b1=ch1_b, w2=ch2_w, b2=ch2_b))


# ----------------------------------------------------------------------------
# DistributedGPT3_Cls.forward (train=True, use_cls=True)
# ----------------------------------------------------------------------------
def forward(params, cfg, image, text_ids, text_attn, prompt_lengths,
            prompt_ids, prompt_attn, labels):
    B = image.shape[0]
    Q = cfg["num_learnable_token"]

    # visual encoder -> attention pool -> visual_fc (visual_norm = Identity)
    _, image_embeds = visual_encoder(image, params["visual"], cfg)
    queries = jnp.broadcast_to(params["learnable_queries"],
                               (B, Q, cfg["vision_width"]))
    image_query = attention_pool(queries, image_embeds, params["attn_pool"],
                                 cfg["vision_heads"])
    query_features = pallas_linear(
        image_query.reshape(B * Q, cfg["vision_width"]),
        params["visual_fc_w"], params["visual_fc_b"]).reshape(B, Q, cfg["text_width"])
    query_atts = jnp.ones((B, Q), jnp.int32)

    S = text_ids.shape[1]
    # ---- caption branch inputs ----
    targets = jnp.concatenate([text_ids[:, 1:], text_ids[:, 0:1]], axis=1)      # (B, S)
    pos = jnp.arange(S - 1)[None, :]
    text_loss_atts = text_attn[:, 1:] * (pos >= prompt_lengths[:, None]).astype(text_attn.dtype)
    empty_targets = jnp.full((B, Q), 100, jnp.int32)
    targets_full = jnp.concatenate([empty_targets, targets], axis=1)            # (B, Q+S)
    input_embeds = params["text_decoder"]["word_emb"][text_ids]                 # (B, S, Dt)
    input_embeds = jnp.concatenate([query_features, input_embeds], axis=1)      # (B, Q+S, Dt)
    attention_mask = jnp.concatenate([query_atts, text_attn], axis=1)           # (B, Q+S)
    loss_mask = jnp.concatenate([1 - query_atts, text_loss_atts], axis=1)       # (B, Q+S-1)
    loss_mask = jnp.concatenate([loss_mask, jnp.zeros((B, 1), loss_mask.dtype)], axis=1)

    # ---- cls branch inputs ----
    targets_tmp = jnp.concatenate([prompt_ids[:, 1:], prompt_ids[:, 0:1]], axis=1)
    targets_tmp = jnp.concatenate([jnp.full((B, Q), 100, jnp.int32), targets_tmp], axis=1)
    input_embeds_p = params["text_decoder"]["word_emb"][prompt_ids]
    input_embeds_p = jnp.concatenate([query_features, input_embeds_p], axis=1)
    attention_mask_p = jnp.concatenate([query_atts, prompt_attn], axis=1)
    text_loss_atts_p = 1 - prompt_attn[:, 1:]
    loss_mask_p = jnp.concatenate([1 - query_atts, text_loss_atts_p], axis=1)
    loss_mask_p = jnp.concatenate([loss_mask_p, jnp.zeros((B, 1), loss_mask_p.dtype)], axis=1)

    # ---- single batched decoder pass (caption rows 0..B-1, cls rows B..2B-1):
    # sequences are independent along the batch axis, so this is exactly equivalent to
    # the two reference text_decoder calls while streaming all layer weights and the
    # (V, D) embedding through the fused LM-head/CE only once.
    emb_all = jnp.concatenate([input_embeds, input_embeds_p], axis=0)
    attn_all = jnp.concatenate([attention_mask, attention_mask_p], axis=0)
    tgt_all = jnp.concatenate([targets_full, targets_tmp], axis=0)
    lmask_all = jnp.concatenate([loss_mask, loss_mask_p], axis=0)
    outputs = gpt3_decoder(params["text_decoder"], emb_all, attn_all,
                           tgt_all, lmask_all, cfg)

    losses_caption = outputs["losses"][:B]                                      # mask-weighted
    denom = jnp.maximum(jnp.sum(loss_mask.astype(jnp.float32)), 1.0)
    loss_caption = jnp.sum(losses_caption) / denom

    # ---- use_cls branch ----
    last_hidden_cls = outputs["last_hidden_state"][B:]                          # (B, L, Dt)
    pooled_idx = jnp.sum(attention_mask_p, axis=-1) - 1
    pooled = last_hidden_cls[jnp.arange(B), pooled_idx]                         # (B, Dt)

    h = pallas_linear(pooled, params["cls_head"]["w1"], params["cls_head"]["b1"], act="relu")
    # final classifier matmul fused with cross-entropy
    cls_losses = pallas_lmhead_ce(h, params["cls_head"]["w2"], params["cls_head"]["b2"],
                                  labels, jnp.ones((B,), jnp.float32))
    loss_cls = jnp.mean(cls_losses)

    return loss_caption, loss_cls


# ----------------------------------------------------------------------------
# Main
# ----------------------------------------------------------------------------
if __name__ == "__main__":
    cfg = dict(
        batch=2, channels=3, frames=2, img_size=16, patch_size=8,
        vision_width=32, vision_depth=1, vision_heads=4, mlp_ratio=4,
        text_width=32, text_depth=1, text_heads=4, vocab_size=64, max_pos=64,
        seq_len=8, num_learnable_token=8, num_classes=3)

    root = jax.random.PRNGKey(0)
    k_param, k_img, k_txt, k_ptxt, k_lab = jax.random.split(root, 5)
    params = init_params(k_param, cfg)

    B, S = cfg["batch"], cfg["seq_len"]
    image = jax.random.normal(
        k_img, (B, cfg["channels"], cfg["frames"], cfg["img_size"], cfg["img_size"]),
        jnp.float32)
    text_ids = jax.random.randint(k_txt, (B, S), 1, cfg["vocab_size"], jnp.int32)
    text_attn = jnp.concatenate(
        [jnp.ones((B, S - 2), jnp.int32), jnp.zeros((B, 2), jnp.int32)], axis=1)
    prompt_lengths = jnp.array([2, 3], jnp.int32)
    prompt_ids = jax.random.randint(k_ptxt, (B, S), 1, cfg["vocab_size"], jnp.int32)
    prompt_attn = jnp.concatenate(
        [jnp.ones((B, S - 1), jnp.int32), jnp.zeros((B, 1), jnp.int32)], axis=1)
    labels = jax.random.randint(k_lab, (B,), 0, cfg["num_classes"], jnp.int32)

    loss_caption, loss_cls = forward(
        params, cfg, image, text_ids, text_attn, prompt_lengths,
        prompt_ids, prompt_attn, labels)

    jax.block_until_ready((loss_caption, loss_cls))
    assert jnp.isfinite(loss_caption) and jnp.isfinite(loss_cls)
    print("KERNEL_OK")
</pallas_src>

<mosaic_0001>
module attributes {stable_mosaic.version = 11 : i64} {
  func.func @_matmul_kernel(%arg0: i32, %arg1: i32, %arg2: i32, %arg3: memref<16x192xbf16, #tpu.memory_space<vmem>>, %arg4: memref<192x32xbf16, #tpu.memory_space<vmem>>, %arg5: memref<1x32xf32, #tpu.memory_space<vmem>>, %arg6: memref<16x32xbf16, #tpu.memory_space<vmem>>, %arg7: memref<16x32xf32, #tpu.memory_space<vmem>>) attributes {dimension_semantics = [#tpu.dimension_semantics<parallel>, #tpu.dimension_semantics<parallel>, #tpu.dimension_semantics<arbitrary>], iteration_bounds = array<i64: 1, 1, 1>, scalar_prefetch = 0 : i64, scratch_operands = 1 : i64, tpu.core_type = #tpu.core_type<tc>, window_params = [{transform_indices = @transform_0, window_bounds = array<i64: 16, 192>}, {transform_indices = @transform_1, window_bounds = array<i64: 192, 32>}, {transform_indices = @transform_2, window_bounds = array<i64: 1, 32>}, {transform_indices = @transform_3, window_bounds = array<i64: 16, 32>}]} {
    %c0_i32 = arith.constant 0 : i32
    %0 = arith.cmpi eq, %arg2, %c0_i32 : i32
    %1 = arith.extui %0 : i1 to i32
    %c0_i32_0 = arith.constant 0 : i32
    %2 = arith.cmpi ne, %1, %c0_i32_0 : i32
    scf.if %2 {
      %cst_10 = arith.constant 0.000000e+00 : f32
      %12 = vector.broadcast %cst_10 : f32 to vector<16x32xf32>
      %c0_11 = arith.constant 0 : index
      %c0_12 = arith.constant 0 : index
      %13 = vector.load %arg7[%c0_11, %c0_12] : memref<16x32xf32, #tpu.memory_space<vmem>>, vector<16x32xf32>
      tpu.vector_store %arg7[%c0_11, %c0_12], %12 {strides = array<i32>} : memref<16x32xf32, #tpu.memory_space<vmem>>, vector<16x32xf32>,
    } else {
    }
    %c0 = arith.constant 0 : index
    %c0_1 = arith.constant 0 : index
    %3 = vector.load %arg7[%c0, %c0_1] : memref<16x32xf32, #tpu.memory_space<vmem>>, vector<16x32xf32>
    %c0_2 = arith.constant 0 : index
    %c0_3 = arith.constant 0 : index
    %4 = vector.load %arg3[%c0_2, %c0_3] : memref<16x192xbf16, #tpu.memory_space<vmem>>, vector<16x192xbf16>
    %c0_4 = arith.constant 0 : index
    %c0_5 = arith.constant 0 : index
    %5 = vector.load %arg4[%c0_4, %c0_5] : memref<192x32xbf16, #tpu.memory_space<vmem>>, vector<192x32xbf16>
    %cst = arith.constant dense<0.000000e+00> : vector<16x32xf32>
    %6 = tpu.matmul %4, %5, %cst {dimension_numbers = #tpu.dot_dimension_numbers<[1], [0], [0], [1], [0, 0, 1, 1], [], []>} : vector<16x192xbf16>, vector<192x32xbf16>, vector<16x32xf32> -> vector<16x32xf32>
    %7 = arith.addf %3, %6 : vector<16x32xf32>
    %c0_6 = arith.constant 0 : index
    %c0_7 = arith.constant 0 : index
    %8 = vector.load %arg7[%c0_6, %c0_7] : memref<16x32xf32, #tpu.memory_space<vmem>>, vector<16x32xf32>
    tpu.vector_store %arg7[%c0_6, %c0_7], %7 {strides = array<i32>} : memref<16x32xf32, #tpu.memory_space<vmem>>, vector<16x32xf32>,
    %c0_i32_8 = arith.constant 0 : i32
    %9 = arith.cmpi eq, %arg2, %c0_i32_8 : i32
    %10 = arith.extui %9 : i1 to i32
    %c0_i32_9 = arith.constant 0 : i32
    %11 = arith.cmpi ne, %10, %c0_i32_9 : i32
    scf.if %11 {
      %c0_10 = arith.constant 0 : index
      %c0_11 = arith.constant 0 : index
      %12 = vector.load %arg7[%c0_10, %c0_11] : memref<16x32xf32, #tpu.memory_space<vmem>>, vector<16x32xf32>
      %c0_12 = arith.constant 0 : index
      %c0_13 = arith.constant 0 : index
      %13 = vector.load %arg5[%c0_12, %c0_13] : memref<1x32xf32, #tpu.memory_space<vmem>>, vector<1x32xf32>
      %14 = vector.broadcast %13 : vector<1x32xf32> to vector<16x32xf32>
      %15 = arith.addf %12, %14 : vector<16x32xf32>
      %16 = arith.truncf %15 : vector<16x32xf32> to vector<16x32xbf16>
      %c0_14 = arith.constant 0 : index
      %c0_15 = arith.constant 0 : index
      %17 = vector.load %arg6[%c0_14, %c0_15] : memref<16x32xbf16, #tpu.memory_space<vmem>>, vector<16x32xbf16>
      tpu.vector_store %arg6[%c0_14, %c0_15], %16 {strides = array<i32>} : memref<16x32xbf16, #tpu.memory_space<vmem>>, vector<16x32xbf16>,
    } else {
    }
    return
  }
  func.func @transform_0(%arg0: i32, %arg1: i32, %arg2: i32) -> (i32, i32) {
    %c0_i32 = arith.constant 0 : i32
    return %arg0, %arg2 : i32, i32
  }
  func.func @transform_1(%arg0: i32, %arg1: i32, %arg2: i32) -> (i32, i32) {
    %c0_i32 = arith.constant 0 : i32
    return %arg2, %arg1 : i32, i32
  }
  func.func @transform_2(%arg0: i32, %arg1: i32, %arg2: i32) -> (i32, i32) {
    %c0_i32 = arith.constant 0 : i32
    %c0_i32_0 = arith.constant 0 : i32
    return %c0_i32, %arg1 : i32, i32
  }
  func.func @transform_3(%arg0: i32, %arg1: i32, %arg2: i32) -> (i32, i32) {
    %c0_i32 = arith.constant 0 : i32
    return %arg0, %arg1 : i32, i32
  }
}

</mosaic_0001>

<llo_original>
// kernel: tpu_custom_call.1
$region0: #{tpu_custom_call.1}
  #allocation0 [shape = 'u32[]', space=smem, size = 0x4, offset = 0x4, fixed_abs, tag = 'smem constant byte address 0x4 - core index']
  #allocation1 [shape = 'u32[144,128]{1,0:T(1,128)}', space=vmem, size = 0x12000, scoped, tag = 'internal scratch']
  #allocation2 [shape = 'f32[16,32]{1,0:T(8,128)}', space=vmem, size = 0x2000, scoped, tag = 'scratch operand']
  %s0 = inlined_call_operand.vmem [shape: bf16[16,192], index: 0, kind: input, shape index: {}]
  %s1 = inlined_call_operand.vmem [shape: bf16[192,32], index: 1, kind: input, shape index: {}]
  %s2 = inlined_call_operand.vmem [shape: f32[1,32], index: 2, kind: input, shape index: {}]
  %s3 = inlined_call_operand.hbm [shape: bf16[16,32], index: 3, kind: output, shape index: {}]
  %s4 = sld [smem:[#allocation0]]
  $region30: #{tpu_custom_call.1} parent=0
    _
  %s6 = ssub.s32 1, %s4
  %s7 = scalar_select 0, %s6, %s4
  $region1: #{tpu_custom_call.1} parent=0
    #allocation3 [shape = 'u8[4096]{0}', space=vmem, size = 0x1000, scoped, tag = 'output window, operand 0, single buffered']
    #allocation4 [shape = 's32[1]{0}', space=sflag, size = 0x4, scoped, tag = 'scoped memory for tpu_custom_call.1']
    %8 = vsyncpa [#allocation4], 0
    // Predicated region
    $region2: #{tpu_custom_call.1} parent=1 // pred_check
      _
    $region3: #{tpu_custom_call.1} parent=1 // pred_check_branch
      %10 = sbr.rel (0) target = $region5
    $region4: #{tpu_custom_call.1} parent=1 // pred_region
      _
    $region5: #{tpu_custom_call.1} parent=1 // pred_fallthru
      _
    // Predicated region
    $region6: #{tpu_custom_call.1} parent=1 // pred_check
      _
    $region7: #{tpu_custom_call.1} parent=1 // pred_check_branch
      %12 = sbr.rel (0) target = $region9
    $region8: #{tpu_custom_call.1} parent=1 // pred_region
      _
    $region9: #{tpu_custom_call.1} parent=1 // pred_fallthru
      _
    // Predicated region
    $region10: #{tpu_custom_call.1} parent=1 // pred_check
      _
    $region11: #{tpu_custom_call.1} parent=1 // pred_check_branch
      %14 = sbr.rel (0) target = $region13
    $region12: #{tpu_custom_call.1} parent=1 // pred_region
      _
    $region13: #{tpu_custom_call.1} parent=1 // pred_fallthru
      _
    %p16 = scmp.eq.s32.totalorder 0, 0
    // Predicated region
    $region14: #{tpu_custom_call.1} parent=1 // pred_check
      %p17 = pneg %p16
    $region15: #{tpu_custom_call.1} parent=1 // pred_check_branch
      %19 = sbr.rel (%p17) target = $region17
    $region16: #{tpu_custom_call.1} parent=1 // pred_region
      %vm20 = vcmask 261120
      %21 = vst.msk [vmem:[#allocation2] sm:$0xff] %vm20, 0.0
      %22 = vst.msk [vmem:[#allocation2 + $0x8] sm:$0xff] %vm20, 0.0
    $region17: #{tpu_custom_call.1} parent=1 // pred_fallthru
      _
    %v23 = vld [vmem:[#allocation2] sm:$0xff]
    %v24 = vld [vmem:[#allocation2 + $0x8] sm:$0xff]
    %v25 = vld [vmem:[%s0] sm:$0xff]
    %v26 = vld [vmem:[%s0 + $0x8] sm:$0xff]
    %v27 = vld [vmem:[%s1] sm:$0xf]
    %v28 = vld [vmem:[%s1 + $0x4] sm:$0xf]
    %v29 = vld [vmem:[%s1 + $0x8] sm:$0xf]
    %v30 = vld [vmem:[%s1 + $0xc] sm:$0xf]
    %v31 = vld [vmem:[%s1 + $0x10] sm:$0xf]
    %v32 = vld [vmem:[%s1 + $0x14] sm:$0xf]
    %v33 = vld [vmem:[%s1 + $0x18] sm:$0xf]
    %v34 = vld [vmem:[%s1 + $0x1c] sm:$0xf]
    %v35 = vld [vmem:[%s1 + $0x20] sm:$0xf]
    %v36 = vld [vmem:[%s1 + $0x24] sm:$0xf]
    %v37 = vld [vmem:[%s1 + $0x28] sm:$0xf]
    %v38 = vld [vmem:[%s1 + $0x2c] sm:$0xf]
    %v39 = vld [vmem:[%s1 + $0x30] sm:$0xf]
    %v40 = vld [vmem:[%s1 + $0x34] sm:$0xf]
    %v41 = vld [vmem:[%s1 + $0x38] sm:$0xf]
    %v42 = vld [vmem:[%s1 + $0x3c] sm:$0xf]
    %v43 = vld [vmem:[%s1 + $0x40] sm:$0xf]
    %v44 = vld [vmem:[%s1 + $0x44] sm:$0xf]
    %v45 = vld [vmem:[%s1 + $0x48] sm:$0xf]
    %v46 = vld [vmem:[%s1 + $0x4c] sm:$0xf]
    %v47 = vld [vmem:[%s1 + $0x50] sm:$0xf]
    %v48 = vld [vmem:[%s1 + $0x54] sm:$0xf]
    %v49 = vld [vmem:[%s1 + $0x58] sm:$0xf]
    %v50 = vld [vmem:[%s1 + $0x5c] sm:$0xf]
    %v53 = vunpack.c.l.b16 %v25
    %v54 = vunpack.c.h.b16 %v25
    %v55 = vunpack.c.l.b16 %v26
    %v56 = vunpack.c.h.b16 %v26
    %v57 = vpack.c.b16 %v55, %v53
    %v58 = vpack.c.b16 %v56, %v54
    %v84 = vunpack.c.l.b16 %v27
    %v85 = vunpack.c.l.b16 %v28
    %v86 = vunpack.c.l.b16 %v29
    %v87 = vunpack.c.l.b16 %v30
    %v88 = vunpack.c.l.b16 %v31
    %v89 = vunpack.c.l.b16 %v32
    %v90 = vunpack.c.l.b16 %v33
    %v91 = vunpack.c.l.b16 %v34
    %v92 = vunpack.c.l.b16 %v35
    %v93 = vunpack.c.l.b16 %v36
    %v94 = vunpack.c.l.b16 %v37
    %v95 = vunpack.c.l.b16 %v38
    %v96 = vunpack.c.l.b16 %v39
    %v97 = vunpack.c.l.b16 %v40
    %v98 = vunpack.c.l.b16 %v41
    %v99 = vunpack.c.l.b16 %v42
    %v100 = vunpack.c.l.b16 %v43
    %v101 = vunpack.c.l.b16 %v44
    %v102 = vunpack.c.l.b16 %v45
    %v103 = vunpack.c.l.b16 %v46
    %v104 = vunpack.c.l.b16 %v47
    %v105 = vunpack.c.l.b16 %v48
    %v106 = vunpack.c.l.b16 %v49
    %v107 = vunpack.c.l.b16 %v50
    %v108 = vpack.c.b16 %v85, %v84
    %v109 = vpack.c.b16 %v87, %v86
    %v110 = vpack.c.b16 %v89, %v88
    %v111 = vpack.c.b16 %v91, %v90
    %v112 = vpack.c.b16 %v93, %v92
    %v113 = vpack.c.b16 %v95, %v94
    %v114 = vpack.c.b16 %v97, %v96
    %v115 = vpack.c.b16 %v99, %v98
    %v116 = vpack.c.b16 %v101, %v100
    %v117 = vpack.c.b16 %v103, %v102
    %v118 = vpack.c.b16 %v105, %v104
    %v119 = vpack.c.b16 %v107, %v106
    %vm132 = vcmask 523264
    %v134 = vsel %vm132, %v58, 0
    %136 = vmatprep.subr.bf16.mxu0 0
    %137 = vmatpush1.bf16.msra.mxu0 %v108
    %138 = vmatprep.subr.bf16.mxu0 0
    %139 = vmatpush1.bf16.msra.mxu0 %v109
    %140 = vmatprep.subr.bf16.mxu0 0
    %141 = vmatpush1.bf16.msra.mxu0 %v110
    %142 = vmatprep.subr.bf16.mxu0 0
    %143 = vmatpush1.bf16.msra.mxu0 %v111
    %144 = vmatprep.subr.bf16.mxu0 0
    %145 = vmatpush1.bf16.msra.mxu0 %v112
    %146 = vmatprep.subr.bf16.mxu0 0
    %147 = vmatpush1.bf16.msra.mxu0 %v113
    %148 = vmatprep.subr.bf16.mxu0 0
    %149 = vmatpush1.bf16.msra.mxu0 %v114
    %150 = vmatprep.subr.bf16.mxu0 0
    %151 = vmatpush1.bf16.msra.mxu0 %v115
    %152 = vmatprep.subr.bf16.mxu0 0
    %153 = vmatpush1.bf16.msra.mxu0 %v116
    %154 = vmatprep.subr.bf16.mxu0 0
    %155 = vmatpush1.bf16.msra.mxu0 %v117
    %156 = vmatprep.subr.bf16.mxu0 0
    %157 = vmatpush1.bf16.msra.mxu0 %v118
    %158 = vmatprep.subr.bf16.mxu0 0
    %159 = vmatpush1.bf16.msra.mxu0 %v119
    %160 = vmatprep.subr.bf16.mxu0 0
    %161 = vmatpush1.bf16.msra.mxu0 0
    %162 = vmatprep.subr.bf16.mxu0 0
    %163 = vmatpush1.bf16.msra.mxu0 0
    %164 = vmatprep.subr.bf16.mxu0 0
    %165 = vmatpush1.bf16.msra.mxu0 0
    %166 = vmatprep.subr.bf16.mxu0 0
    %167 = vmatpush1.bf16.msra.mxu0 0
    %168 = vmatprep.mubr.bf16.mxu0 %v134
    %169 = vmatmul.mubr.bf16.gmra.mrb[0].mxu0 %v57
    %v170 = vpop.f32.mrb[0].mxu0
    %v171 = vadd.f32 0.0, %v170
    %v172 = vpop.f32.mrb[0].mxu0
    %v173 = vpop.f32.mrb[0].mxu0
    %v174 = vadd.f32 0.0, %v173
    %v175 = vpop.f32.mrb[0].mxu0
    %176 = vdwg.mxu0
    %v177 = vadd.f32 %v23, %v171
    %v178 = vadd.f32 %v24, %v174
    %vm179 = vcmask 261120
    %180 = vst.msk [vmem:[#allocation2] sm:$0xff] %vm179, %v177
    %181 = vst.msk [vmem:[#allocation2 + $0x8] sm:$0xff] %vm179, %v178
    // Predicated region
    $region18: #{tpu_custom_call.1} parent=1 // pred_check
      %p182 = pneg %p16
    $region19: #{tpu_custom_call.1} parent=1 // pred_check_branch
      %184 = sbr.rel (%p182) target = $region21
    $region20: #{tpu_custom_call.1} parent=1 // pred_region
      %v185 = vld [vmem:[#allocation2] sm:$0xff]
      %v186 = vld [vmem:[#allocation2 + $0x8] sm:$0xff]
      %v187 = vld [vmem:[%s2] sm:$0x1]
      %v189 = vlaneseq
      %v190 = vshrl.u32 %v189, 7
      %v191 = vsub.s32 0, %v190
      %v192 = vrot.slane %v187, %v191
      %v194 = vadd.f32 %v185, %v192
      %v195 = vadd.f32 %v186, %v192
      %v196 = vpack.c.bf16 %v195, %v194
      %v198 = vunpack.c.l.b16 %v196
      %v199 = vunpack.c.h.b16 %v196
      %v200 = vpack.c.b16 %v198, %v198
      %v201 = vpack.c.b16 %v199, %v199
      %vm204 = vcmask 257024
      %205 = vst.msk [vmem:[#allocation3] sm:$0xf] %vm204, %v200
      %206 = vst.msk [vmem:[#allocation3 + $0x4] sm:$0xf] %vm204, %v201
    $region21: #{tpu_custom_call.1} parent=1 // pred_fallthru
      _
    // Predicated region
    $region22: #{tpu_custom_call.1} parent=1 // pred_check
      _
    $region23: #{tpu_custom_call.1} parent=1 // pred_check_branch
      %208 = sbr.rel (0) target = $region25
    $region24: #{tpu_custom_call.1} parent=1 // pred_region
      %s210 = ssub.s32 128, 128
      %211 = vsyncadd [#allocation4], %s210
      %s212 = sshll.u32 [#allocation3], 4
      %s213 = int_to_ptr.vmem [resolvable:$true] %s212
      %218 = dma.vmem_to_hbm [thread:$0]  %s213, 128, %s3, [#allocation4], 64, 64, 4
    $region25: #{tpu_custom_call.1} parent=1 // pred_fallthru
      _
    // Predicated region
    $region26: #{tpu_custom_call.1} parent=1 // pred_check
      _
    $region27: #{tpu_custom_call.1} parent=1 // pred_check_branch
      %220 = sbr.rel (0) target = $region29
    $region28: #{tpu_custom_call.1} parent=1 // pred_region
      %221 = dma.done [#allocation4], 128
    $region29: #{tpu_custom_call.1} parent=1 // pred_fallthru
      _
    %222 = vsyncpa [#allocation4], 1

</llo_original>
